<compile_context>
chip_gen: v7x
topology: tpu7x:2x2x1
jax: 0.10.0
libtpu: 0.0.40
codegen_flags: <defaults>
</compile_context>

<pallas_src>
import functools

import jax
import jax.numpy as jnp
from jax.experimental import pallas as pl
from jax.experimental.pallas import tpu as pltpu

BN_EPS = 1e-5
K = 3  # body conv kernel size


# ------------------------------ fused kernel ------------------------------- #

def _resblock_kernel(x_ref, xs_ref, w1_ref, b1_ref, w2_ref, b2_ref,
                     o_ref, h_scr, *, L, T, Th, stride, has_sc_conv):
    """One output-length tile of one batch element of the fused ResBlock.

    x_ref : (1, L+4, Cin) f32   input, zero-padded by 2 each side, resident over tiles
    xs_ref: (1, T, Cin)   f32   pre-strided shortcut input for this tile
    w1_ref: (3*Cin, Cout) bf16  im2col conv1 weights, BN1 scale folded in
    b1_ref: (1, Cout)     f32   conv1 bias + BN1 shift
    w2_ref: (3*Cout[+Cin], Cout) bf16  conv2 (+1x1 shortcut) weights, BN2 folded
    b2_ref: (1, Cout)     f32   conv2 bias + BN2 shift (+ shortcut bias)
    o_ref : (1, T, Cout)  f32   output tile
    h_scr : (Th, Cout)    f32   conv1 output rows needed by this tile (VMEM)
    """
    lt = pl.program_id(1)
    o0 = lt * T                                    # first output position of tile
    x0 = pl.multiple_of(o0 * stride, T * stride)   # matching offset into x_pad

    # -- conv1 (k=3, stride 1, 'same') + BN1 + ReLU : one MXU matmul ----------
    xcat = jnp.concatenate(
        [x_ref[0, pl.ds(x0 + t, Th), :].astype(jnp.bfloat16) for t in range(K)],
        axis=-1)                                   # (Th, 3*Cin) in-kernel im2col
    h = jnp.dot(xcat, w1_ref[...], preferred_element_type=jnp.float32)
    h = jnp.maximum(h + b1_ref[...], 0.0)
    # conv2 zero-pads the *post-BN/ReLU* activation: rows whose h-index falls
    # outside [0, L) must be exactly zero.
    hp = jax.lax.broadcasted_iota(jnp.int32, h.shape, 0) + (stride * o0 - 1)
    h_scr[...] = jnp.where((hp >= 0) & (hp < L), h, 0.0)

    # -- conv2 (k=3, stride) + BN2 (+ folded 1x1 shortcut): one MXU matmul ----
    if stride == 1:
        htaps = [h_scr[pl.ds(t, T), :] for t in range(K)]
    else:
        htaps = [h_scr[pl.ds(t, T, stride), :] for t in range(K)]
    cat = [ht.astype(jnp.bfloat16) for ht in htaps]
    if has_sc_conv:
        cat.append(xs_ref[0].astype(jnp.bfloat16))  # 1x1 shortcut in the contraction
    y = jnp.dot(jnp.concatenate(cat, axis=-1), w2_ref[...],
                preferred_element_type=jnp.float32) + b2_ref[...]
    if not has_sc_conv:
        y = y + xs_ref[0]                           # identity shortcut (exact f32)
    o_ref[0] = jnp.maximum(y, 0.0)


# ------------------------------ wrapper / fold ------------------------------ #

def resblock_kan_forward(params, x_ncl, *, stride, l_tile=None):
    """ResBlockKAN forward.  x_ncl: (N, Cin, L) PyTorch layout -> (N, Cout, Lout)."""
    n, cin, l = x_ncl.shape
    w1, b1c = params['conv1']
    w2, b2c = params['conv2']
    cout = w1.shape[0]
    has_sc_conv = 'xt' in params
    lout = (l - 1) // stride + 1

    # fold eval-mode BatchNorm:  BN(conv(x)) = conv_scaled(x) + shift
    def bn_fold(bn, bias):
        gamma, beta, mean, var = bn
        s = gamma * jax.lax.rsqrt(var + BN_EPS)
        return s, beta + (bias - mean) * s

    s1, shift1 = bn_fold(params['bn1'], b1c)
    s2, shift2 = bn_fold(params['bn2'], b2c)

    # im2col weight layout (K*Cin, Cout); BN scale folded into the columns.
    w1f = jnp.transpose(w1, (2, 1, 0)).reshape(K * cin, cout) * s1[None, :]
    w2f = jnp.transpose(w2, (2, 1, 0)).reshape(K * cout, cout) * s2[None, :]
    if has_sc_conv:
        wx, bx = params['xt']                                   # (Cout, Cin, 1), (Cout,)
        w2f = jnp.concatenate([w2f, wx[:, :, 0].T], axis=0)     # shortcut rows (no BN)
        shift2 = shift2 + bx
    w1f = w1f.astype(jnp.bfloat16)
    w2f = w2f.astype(jnp.bfloat16)
    shift1 = shift1.reshape(1, cout).astype(jnp.float32)
    shift2 = shift2.reshape(1, cout).astype(jnp.float32)

    # channels-last activations; 2-halo zero pad covers conv1's 'same' padding
    # plus conv2's halo, so length tiles only need in-kernel shifted reads.
    x = jnp.transpose(x_ncl, (0, 2, 1)).astype(jnp.float32)     # (N, L, Cin)
    xp = jnp.pad(x, ((0, 0), (2, 2), (0, 0)))                   # (N, L+4, Cin)
    xs = x[:, ::stride, :]                                      # (N, Lout, Cin) shortcut in
    lp = l + 4

    if l_tile is None:
        l_tile = lout
    assert lout % l_tile == 0, "l_tile must divide the output length"
    t = l_tile
    th = stride * (t - 1) + K                                   # conv1 rows per tile
    grid = (n, lout // t)

    kernel = functools.partial(_resblock_kernel, L=l, T=t, Th=th,
                               stride=stride, has_sc_conv=has_sc_conv)

    y = pl.pallas_call(
        kernel,
        out_shape=jax.ShapeDtypeStruct((n, lout, cout), jnp.float32),
        grid=grid,
        in_specs=[
            pl.BlockSpec((1, lp, cin), lambda b, i: (b, 0, 0)),  # stays resident over i
            pl.BlockSpec((1, t, cin), lambda b, i: (b, i, 0)),
            pl.BlockSpec(w1f.shape, lambda b, i: (0, 0)),
            pl.BlockSpec((1, cout), lambda b, i: (0, 0)),
            pl.BlockSpec(w2f.shape, lambda b, i: (0, 0)),
            pl.BlockSpec((1, cout), lambda b, i: (0, 0)),
        ],
        out_specs=pl.BlockSpec((1, t, cout), lambda b, i: (b, i, 0)),
        scratch_shapes=[pltpu.VMEM((th, cout), jnp.float32)],
        compiler_params=pltpu.CompilerParams(
            dimension_semantics=("parallel", "parallel")),
    )(xp, xs, w1f, shift1, w2f, shift2)

    return jnp.transpose(y, (0, 2, 1))                          # back to (N, Cout, Lout)


# ----------------------------- params / reference --------------------------- #

def init_conv(key, cin, cout, k):
    # PyTorch Conv1d default init: U(-1/sqrt(fan_in), 1/sqrt(fan_in))
    kw, kb = jax.random.split(key)
    bound = 1.0 / float(cin * k) ** 0.5
    w = jax.random.uniform(kw, (cout, cin, k), jnp.float32, -bound, bound)
    b = jax.random.uniform(kb, (cout,), jnp.float32, -bound, bound)
    return w, b


def init_bn(c):
    # eval-mode BatchNorm1d: (gamma, beta, running_mean, running_var)
    return (jnp.ones((c,), jnp.float32), jnp.zeros((c,), jnp.float32),
            jnp.zeros((c,), jnp.float32), jnp.ones((c,), jnp.float32))


def init_resblock(key, cin, cout, stride):
    k1, k2, k3 = jax.random.split(key, 3)
    p = {'conv1': init_conv(k1, cin, cout, K), 'bn1': init_bn(cout),
         'conv2': init_conv(k2, cout, cout, K), 'bn2': init_bn(cout)}
    if cout != cin or stride > 1:
        p['xt'] = init_conv(k3, cin, cout, 1)   # 1x1 projection shortcut
    return p


def _conv1d_ref(x, w, b, stride, padding):
    y = jax.lax.conv_general_dilated(
        x, w, window_strides=(stride,), padding=[(padding, padding)],
        dimension_numbers=('NCH', 'OIH', 'NCH'))
    return y + b[None, :, None]


def resblock_kan_ref(params, x, *, stride):
    # pure-XLA reference of the PyTorch forward (eval-mode BN)
    def bn(h, bnp):
        gamma, beta, mean, var = bnp
        inv = gamma / jnp.sqrt(var + BN_EPS)
        return (h - mean[None, :, None]) * inv[None, :, None] + beta[None, :, None]

    h = jax.nn.relu(bn(_conv1d_ref(x, *params['conv1'], 1, 1), params['bn1']))
    h = bn(_conv1d_ref(h, *params['conv2'], stride, 1), params['bn2'])
    r = _conv1d_ref(x, *params['xt'], stride, 0) if 'xt' in params else x
    return jax.nn.relu(h + r)


# ----------------------------------- main ----------------------------------- #

if __name__ == "__main__":
    key = jax.random.PRNGKey(0)
    kpa, kpb, kxa, kxb = jax.random.split(key, 4)

    N, L = 2, 128
    fwd = jax.jit(resblock_kan_forward, static_argnames=("stride", "l_tile"))

    # Config A: identity shortcut (in == out == 32 channels, stride 1)
    pA = init_resblock(kpa, 32, 32, stride=1)
    xA = jax.random.normal(kxa, (N, 32, L), jnp.float32)        # PyTorch (N, C, L)
    outA = jax.block_until_ready(fwd(pA, xA, stride=1, l_tile=32))
    assert outA.shape == (N, 32, L)
    assert bool(jnp.allclose(outA, resblock_kan_ref(pA, xA, stride=1),
                             rtol=5e-2, atol=5e-2))

    # Config B: 1x1 projection shortcut (16 -> 32 channels, stride 2)
    pB = init_resblock(kpb, 16, 32, stride=2)
    xB = jax.random.normal(kxb, (N, 16, L), jnp.float32)
    outB = jax.block_until_ready(fwd(pB, xB, stride=2, l_tile=32))
    assert outB.shape == (N, 32, L // 2)
    assert bool(jnp.allclose(outB, resblock_kan_ref(pB, xB, stride=2),
                             rtol=5e-2, atol=5e-2))

    assert bool(jnp.all(jnp.isfinite(outA))) and bool(jnp.all(jnp.isfinite(outB)))
    print("KERNEL_OK")
</pallas_src>

<mosaic_0001>
module attributes {stable_mosaic.version = 11 : i64} {
  func.func @_resblock_kernel(%arg0: i32, %arg1: i32, %arg2: memref<1x132x32xf32, #tpu.memory_space<vmem>>, %arg3: memref<1x32x32xf32, #tpu.memory_space<vmem>>, %arg4: memref<96x32xbf16, #tpu.memory_space<vmem>>, %arg5: memref<1x32xf32, #tpu.memory_space<vmem>>, %arg6: memref<96x32xbf16, #tpu.memory_space<vmem>>, %arg7: memref<1x32xf32, #tpu.memory_space<vmem>>, %arg8: memref<1x32x32xf32, #tpu.memory_space<vmem>>, %arg9: memref<34x32xf32, #tpu.memory_space<vmem>>) attributes {dimension_semantics = [#tpu.dimension_semantics<parallel>, #tpu.dimension_semantics<parallel>], iteration_bounds = array<i64: 2, 4>, scalar_prefetch = 0 : i64, scratch_operands = 1 : i64, tpu.core_type = #tpu.core_type<tc>, window_params = [{transform_indices = @transform_0, window_bounds = array<i64: 1, 132, 32>}, {transform_indices = @transform_1, window_bounds = array<i64: 1, 32, 32>}, {pipeline_mode = #tpu.pipeline_mode<synchronous>, transform_indices = @transform_2, window_bounds = array<i64: 96, 32>}, {pipeline_mode = #tpu.pipeline_mode<synchronous>, transform_indices = @transform_3, window_bounds = array<i64: 1, 32>}, {pipeline_mode = #tpu.pipeline_mode<synchronous>, transform_indices = @transform_4, window_bounds = array<i64: 96, 32>}, {pipeline_mode = #tpu.pipeline_mode<synchronous>, transform_indices = @transform_5, window_bounds = array<i64: 1, 32>}, {transform_indices = @transform_6, window_bounds = array<i64: 1, 32, 32>}]} {
    %c32_i32 = arith.constant 32 : i32
    %0 = arith.muli %arg1, %c32_i32 : i32
    %c1_i32 = arith.constant 1 : i32
    %1 = arith.muli %0, %c1_i32 : i32
    %2 = tpu.assume_multiple %1, 32 : i32
    %c0_i32 = arith.constant 0 : i32
    %3 = arith.addi %2, %c0_i32 : i32
    %c0 = arith.constant 0 : index
    %4 = arith.index_cast %3 : i32 to index
    %c0_0 = arith.constant 0 : index
    %5 = vector.load %arg2[%c0, %4, %c0_0] : memref<1x132x32xf32, #tpu.memory_space<vmem>>, vector<1x34x32xf32>
    %6 = vector.shape_cast %5 : vector<1x34x32xf32> to vector<34x32xf32>
    %7 = arith.truncf %6 : vector<34x32xf32> to vector<34x32xbf16>
    %c1_i32_1 = arith.constant 1 : i32
    %8 = arith.addi %2, %c1_i32_1 : i32
    %c0_2 = arith.constant 0 : index
    %9 = arith.index_cast %8 : i32 to index
    %c0_3 = arith.constant 0 : index
    %10 = vector.load %arg2[%c0_2, %9, %c0_3] : memref<1x132x32xf32, #tpu.memory_space<vmem>>, vector<1x34x32xf32>
    %11 = vector.shape_cast %10 : vector<1x34x32xf32> to vector<34x32xf32>
    %12 = arith.truncf %11 : vector<34x32xf32> to vector<34x32xbf16>
    %c2_i32 = arith.constant 2 : i32
    %13 = arith.addi %2, %c2_i32 : i32
    %c0_4 = arith.constant 0 : index
    %14 = arith.index_cast %13 : i32 to index
    %c0_5 = arith.constant 0 : index
    %15 = vector.load %arg2[%c0_4, %14, %c0_5] : memref<1x132x32xf32, #tpu.memory_space<vmem>>, vector<1x34x32xf32>
    %16 = vector.shape_cast %15 : vector<1x34x32xf32> to vector<34x32xf32>
    %17 = arith.truncf %16 : vector<34x32xf32> to vector<34x32xbf16>
    %18 = tpu.concatenate %7, %12, %17 in 1 : vector<34x32xbf16>, vector<34x32xbf16>, vector<34x32xbf16> -> vector<34x96xbf16>
    %c0_6 = arith.constant 0 : index
    %c0_7 = arith.constant 0 : index
    %19 = vector.load %arg4[%c0_6, %c0_7] : memref<96x32xbf16, #tpu.memory_space<vmem>>, vector<96x32xbf16>
    %cst = arith.constant dense<0.000000e+00> : vector<34x32xf32>
    %20 = tpu.matmul %18, %19, %cst {dimension_numbers = #tpu.dot_dimension_numbers<[1], [0], [0], [1], [0, 0, 1, 1], [], []>} : vector<34x96xbf16>, vector<96x32xbf16>, vector<34x32xf32> -> vector<34x32xf32>
    %c0_8 = arith.constant 0 : index
    %c0_9 = arith.constant 0 : index
    %21 = vector.load %arg5[%c0_8, %c0_9] : memref<1x32xf32, #tpu.memory_space<vmem>>, vector<1x32xf32>
    %22 = vector.broadcast %21 : vector<1x32xf32> to vector<34x32xf32>
    %23 = arith.addf %20, %22 : vector<34x32xf32>
    %cst_10 = arith.constant 0.000000e+00 : f32
    %24 = vector.broadcast %cst_10 : f32 to vector<34x32xf32>
    %25 = arith.maximumf %23, %24 : vector<34x32xf32>
    %26 = tpu.iota {dimensions = array<i32: 0>} : vector<34x32xi32>
    %c1_i32_11 = arith.constant 1 : i32
    %27 = arith.muli %c1_i32_11, %0 : i32
    %c1_i32_12 = arith.constant 1 : i32
    %28 = arith.subi %27, %c1_i32_12 : i32
    %29 = vector.broadcast %28 : i32 to vector<34x32xi32>
    %30 = arith.addi %26, %29 : vector<34x32xi32>
    %c0_i32_13 = arith.constant 0 : i32
    %31 = vector.broadcast %c0_i32_13 : i32 to vector<34x32xi32>
    %32 = arith.cmpi sge, %30, %31 : vector<34x32xi32>
    %c128_i32 = arith.constant 128 : i32
    %33 = vector.broadcast %c128_i32 : i32 to vector<34x32xi32>
    %34 = arith.cmpi slt, %30, %33 : vector<34x32xi32>
    %35 = arith.andi %32, %34 : vector<34x32xi1>
    %cst_14 = arith.constant 0.000000e+00 : f32
    %36 = vector.broadcast %cst_14 : f32 to vector<34x32xf32>
    %37 = arith.select %35, %25, %36 : vector<34x32xi1>, vector<34x32xf32>
    %c0_15 = arith.constant 0 : index
    %c0_16 = arith.constant 0 : index
    %38 = vector.load %arg9[%c0_15, %c0_16] : memref<34x32xf32, #tpu.memory_space<vmem>>, vector<34x32xf32>
    tpu.vector_store %arg9[%c0_15, %c0_16], %37 {strides = array<i32>} : memref<34x32xf32, #tpu.memory_space<vmem>>, vector<34x32xf32>,
    %c0_17 = arith.constant 0 : index
    %c0_18 = arith.constant 0 : index
    %39 = vector.load %arg9[%c0_17, %c0_18] : memref<34x32xf32, #tpu.memory_space<vmem>>, vector<32x32xf32>
    %c1 = arith.constant 1 : index
    %c0_19 = arith.constant 0 : index
    %40 = vector.load %arg9[%c1, %c0_19] : memref<34x32xf32, #tpu.memory_space<vmem>>, vector<32x32xf32>
    %c2 = arith.constant 2 : index
    %c0_20 = arith.constant 0 : index
    %41 = vector.load %arg9[%c2, %c0_20] : memref<34x32xf32, #tpu.memory_space<vmem>>, vector<32x32xf32>
    %42 = arith.truncf %39 : vector<32x32xf32> to vector<32x32xbf16>
    %43 = arith.truncf %40 : vector<32x32xf32> to vector<32x32xbf16>
    %44 = arith.truncf %41 : vector<32x32xf32> to vector<32x32xbf16>
    %45 = tpu.concatenate %42, %43, %44 in 1 : vector<32x32xbf16>, vector<32x32xbf16>, vector<32x32xbf16> -> vector<32x96xbf16>
    %c0_21 = arith.constant 0 : index
    %c0_22 = arith.constant 0 : index
    %46 = vector.load %arg6[%c0_21, %c0_22] : memref<96x32xbf16, #tpu.memory_space<vmem>>, vector<96x32xbf16>
    %cst_23 = arith.constant dense<0.000000e+00> : vector<32x32xf32>
    %47 = tpu.matmul %45, %46, %cst_23 {dimension_numbers = #tpu.dot_dimension_numbers<[1], [0], [0], [1], [0, 0, 1, 1], [], []>} : vector<32x96xbf16>, vector<96x32xbf16>, vector<32x32xf32> -> vector<32x32xf32>
    %c0_24 = arith.constant 0 : index
    %c0_25 = arith.constant 0 : index
    %48 = vector.load %arg7[%c0_24, %c0_25] : memref<1x32xf32, #tpu.memory_space<vmem>>, vector<1x32xf32>
    %49 = vector.broadcast %48 : vector<1x32xf32> to vector<32x32xf32>
    %50 = arith.addf %47, %49 : vector<32x32xf32>
    %c0_26 = arith.constant 0 : index
    %c0_27 = arith.constant 0 : index
    %c0_28 = arith.constant 0 : index
    %51 = vector.load %arg3[%c0_26, %c0_27, %c0_28] : memref<1x32x32xf32, #tpu.memory_space<vmem>>, vector<1x32x32xf32>
    %52 = vector.shape_cast %51 : vector<1x32x32xf32> to vector<32x32xf32>
    %53 = arith.addf %50, %52 : vector<32x32xf32>
    %cst_29 = arith.constant 0.000000e+00 : f32
    %54 = vector.broadcast %cst_29 : f32 to vector<32x32xf32>
    %55 = arith.maximumf %53, %54 : vector<32x32xf32>
    %c0_30 = arith.constant 0 : index
    %c0_31 = arith.constant 0 : index
    %c0_32 = arith.constant 0 : index
    %56 = vector.load %arg8[%c0_30, %c0_31, %c0_32] : memref<1x32x32xf32, #tpu.memory_space<vmem>>, vector<1x32x32xf32>
    %57 = vector.shape_cast %56 : vector<1x32x32xf32> to vector<32x32xf32>
    %58 = vector.shape_cast %55 : vector<32x32xf32> to vector<1x32x32xf32>
    tpu.vector_store %arg8[%c0_30, %c0_31, %c0_32], %58 {strides = array<i32>} : memref<1x32x32xf32, #tpu.memory_space<vmem>>, vector<1x32x32xf32>,
    return
  }
  func.func @transform_0(%arg0: i32, %arg1: i32) -> (i32, i32, i32) {
    %c0_i32 = arith.constant 0 : i32
    %c0_i32_0 = arith.constant 0 : i32
    %c0_i32_1 = arith.constant 0 : i32
    return %arg0, %c0_i32, %c0_i32_0 : i32, i32, i32
  }
  func.func @transform_1(%arg0: i32, %arg1: i32) -> (i32, i32, i32) {
    %c0_i32 = arith.constant 0 : i32
    %c0_i32_0 = arith.constant 0 : i32
    return %arg0, %arg1, %c0_i32 : i32, i32, i32
  }
  func.func @transform_2(%arg0: i32, %arg1: i32) -> (i32, i32) {
    %c0_i32 = arith.constant 0 : i32
    %c0_i32_0 = arith.constant 0 : i32
    %c0_i32_1 = arith.constant 0 : i32
    return %c0_i32, %c0_i32_0 : i32, i32
  }
  func.func @transform_3(%arg0: i32, %arg1: i32) -> (i32, i32) {
    %c0_i32 = arith.constant 0 : i32
    %c0_i32_0 = arith.constant 0 : i32
    %c0_i32_1 = arith.constant 0 : i32
    return %c0_i32, %c0_i32_0 : i32, i32
  }
  func.func @transform_4(%arg0: i32, %arg1: i32) -> (i32, i32) {
    %c0_i32 = arith.constant 0 : i32
    %c0_i32_0 = arith.constant 0 : i32
    %c0_i32_1 = arith.constant 0 : i32
    return %c0_i32, %c0_i32_0 : i32, i32
  }
  func.func @transform_5(%arg0: i32, %arg1: i32) -> (i32, i32) {
    %c0_i32 = arith.constant 0 : i32
    %c0_i32_0 = arith.constant 0 : i32
    %c0_i32_1 = arith.constant 0 : i32
    return %c0_i32, %c0_i32_0 : i32, i32
  }
  func.func @transform_6(%arg0: i32, %arg1: i32) -> (i32, i32, i32) {
    %c0_i32 = arith.constant 0 : i32
    %c0_i32_0 = arith.constant 0 : i32
    return %arg0, %arg1, %c0_i32 : i32, i32, i32
  }
}

</mosaic_0001>

<llo_original>
// kernel: resblock_kan_forward.1
$region0: #{resblock_kan_forward.1}
  #allocation0 [shape = 'u32[]', space=smem, size = 0x4, offset = 0x4, fixed_abs, tag = 'smem constant byte address 0x4 - core index']
  #allocation1 [shape = 'u32[144,128]{1,0:T(1,128)}', space=vmem, size = 0x12000, scoped, tag = 'internal scratch']
  #allocation2 [shape = 'f32[34,32]{1,0:T(8,128)}', space=vmem, size = 0x5000, scoped, tag = 'scratch operand']
  %s0 = inlined_call_operand.vmem [shape: f32[2,132,32], index: 0, kind: input, shape index: {}]
  %s1 = inlined_call_operand.vmem [shape: f32[2,128,32], index: 1, kind: input, shape index: {}]
  %s2 = inlined_call_operand.vmem [shape: bf16[96,32], index: 2, kind: input, shape index: {}]
  %s3 = inlined_call_operand.vmem [shape: f32[1,32], index: 3, kind: input, shape index: {}]
  %s4 = inlined_call_operand.vmem [shape: bf16[96,32], index: 4, kind: input, shape index: {}]
  %s5 = inlined_call_operand.vmem [shape: f32[1,32], index: 5, kind: input, shape index: {}]
  %s6 = inlined_call_operand.vmem [shape: f32[2,128,32], index: 6, kind: output, shape index: {}]
  %s7 = sld [smem:[#allocation0]]
  $region57: #{resblock_kan_forward.1} parent=0
    _
  %s9 = ssub.s32 1, %s7
  %s10 = scalar_select 0, %s9, %s7
  loop: start=0, step=1, limit=10
  $region2: #{resblock_kan_forward.1} parent=0 // loop_pre_header
    _
  $region3: #{resblock_kan_forward.1} parent=0 // loop_header
    %s12 = sphi 0, %s16
    %p13 = scmp.ge.s32.totalorder %s12, 10
    %s19 = sphi 0, %s31
    %s20 = sphi 0, %s27
    %s21 = sphi 0, %s19
    %s22 = sphi 0, %s20
    %s23 = sphi 0, %s21
    %s24 = sphi 0, %s22
    %s34 = sphi 0, %s36
    %s37 = sphi 0, %s34
    %s38 = sphi 0, %s37
    %s54 = sphi 0, %s38
    %s62 = sphi 0, %s64
    %s65 = sphi 0, %s62
    %s66 = sphi 0, %s65
    %s82 = sphi 0, %s66
    %s86 = sphi 0, %s86
    %s88 = sphi 0, %s86
    %s89 = sphi 0, %s88
    %s103 = sphi 0, %s89
    %s107 = sphi 0, %s107
    %s109 = sphi 0, %s107
    %s110 = sphi 0, %s109
    %s124 = sphi 0, %s110
    %s128 = sphi 0, %s128
    %s130 = sphi 0, %s128
    %s131 = sphi 0, %s130
    %s145 = sphi 0, %s131
    %s149 = sphi 0, %s149
    %s151 = sphi 0, %s149
    %s152 = sphi 0, %s151
    %s166 = sphi 0, %s152
    %s174 = sphi 0, %s176
    %s177 = sphi 0, %s174
    %s178 = sphi 0, %s177
    %s194 = sphi 0, %s178
  $region4: #{resblock_kan_forward.1} parent=0 // loop_header_branch
    %15 = sbr.rel (%p13) target = $region8
  $region5: #{resblock_kan_forward.1} parent=0 // loop_body
    %s17 = ssub.s32 %s12, 1
    %s18 = ssub.s32 %s12, 2
    %s25 = sadd.s32 1, %s20
    %p26 = scmp.ge.s32.totalorder %s25, 4
    %s27 = scalar_select %p26, 0, %s25
    %s28 = sadd.s32 1, %s19
    %s29 = scalar_select %p26, %s28, %s19
    %p30 = scmp.ge.s32.totalorder %s29, 2
    %s31 = scalar_select %p30, 0, %s29
    %s32 = ssub.s32 %s19, %s31
    %p33 = scmp.eq.s32.totalorder %s32, 0
    %s35 = sadd.s32 %s34, 1
    %s36 = scalar_select %p33, %s34, %s35
    %p39 = pneg %p33
    %p40 = scmp.eq.s32.totalorder %s12, 7
    %p41 = por %p39, %p40
    %p42 = scmp.ne.s32.totalorder %s34, %s37
    %p43 = scmp.eq.s32.totalorder %s12, 0
    %p44 = por %p42, %p43
    %p45 = scmp.ne.s32.totalorder %s34, %s37
    %p46 = scmp.eq.s32.totalorder %s17, 7
    %p47 = por %p45, %p46
    %p48 = scmp.ne.s32.totalorder %s37, %s38
    %p49 = scmp.eq.s32.totalorder %s17, 0
    %p50 = por %p48, %p49
    %p51 = scmp.ne.s32.totalorder %s37, %s38
    %p52 = scmp.eq.s32.totalorder %s18, 7
    %p53 = por %p51, %p52
    %p55 = scmp.ne.s32.totalorder %s38, %s54
    %p56 = scmp.eq.s32.totalorder %s18, 0
    %p57 = por %p55, %p56
    %s58 = ssub.s32 %s19, %s31
    %s59 = ssub.s32 %s20, %s27
    %s60 = sor.u32 %s58, %s59
    %p61 = scmp.eq.s32.totalorder %s60, 0
    %s63 = sadd.s32 %s62, 1
    %s64 = scalar_select %p61, %s62, %s63
    %p67 = pneg %p61
    %p68 = scmp.eq.s32.totalorder %s12, 7
    %p69 = por %p67, %p68
    %p70 = scmp.ne.s32.totalorder %s62, %s65
    %p71 = scmp.eq.s32.totalorder %s12, 0
    %p72 = por %p70, %p71
    %p73 = scmp.ne.s32.totalorder %s62, %s65
    %p74 = scmp.eq.s32.totalorder %s17, 7
    %p75 = por %p73, %p74
    %p76 = scmp.ne.s32.totalorder %s65, %s66
    %p77 = scmp.eq.s32.totalorder %s17, 0
    %p78 = por %p76, %p77
    %p79 = scmp.ne.s32.totalorder %s65, %s66
    %p80 = scmp.eq.s32.totalorder %s18, 7
    %p81 = por %p79, %p80
    %p83 = scmp.ne.s32.totalorder %s66, %s82
    %p84 = scmp.eq.s32.totalorder %s18, 0
    %p85 = por %p83, %p84
    %s87 = sadd.s32 %s86, 1
    %p90 = scmp.eq.s32.totalorder %s12, 7
    %p91 = scmp.ne.s32.totalorder %s86, %s88
    %p92 = scmp.eq.s32.totalorder %s12, 0
    %p93 = por %p91, %p92
    %p94 = scmp.ne.s32.totalorder %s86, %s88
    %p95 = scmp.eq.s32.totalorder %s17, 7
    %p96 = por %p94, %p95
    %p97 = scmp.ne.s32.totalorder %s88, %s89
    %p98 = scmp.eq.s32.totalorder %s17, 0
    %p99 = por %p97, %p98
    %p100 = scmp.ne.s32.totalorder %s88, %s89
    %p101 = scmp.eq.s32.totalorder %s18, 7
    %p102 = por %p100, %p101
    %p104 = scmp.ne.s32.totalorder %s89, %s103
    %p105 = scmp.eq.s32.totalorder %s18, 0
    %p106 = por %p104, %p105
    %s108 = sadd.s32 %s107, 1
    %p111 = scmp.eq.s32.totalorder %s12, 7
    %p112 = scmp.ne.s32.totalorder %s107, %s109
    %p113 = scmp.eq.s32.totalorder %s12, 0
    %p114 = por %p112, %p113
    %p115 = scmp.ne.s32.totalorder %s107, %s109
    %p116 = scmp.eq.s32.totalorder %s17, 7
    %p117 = por %p115, %p116
    %p118 = scmp.ne.s32.totalorder %s109, %s110
    %p119 = scmp.eq.s32.totalorder %s17, 0
    %p120 = por %p118, %p119
    %p121 = scmp.ne.s32.totalorder %s109, %s110
    %p122 = scmp.eq.s32.totalorder %s18, 7
    %p123 = por %p121, %p122
    %p125 = scmp.ne.s32.totalorder %s110, %s124
    %p126 = scmp.eq.s32.totalorder %s18, 0
    %p127 = por %p125, %p126
    %s129 = sadd.s32 %s128, 1
    %p132 = scmp.eq.s32.totalorder %s12, 7
    %p133 = scmp.ne.s32.totalorder %s128, %s130
    %p134 = scmp.eq.s32.totalorder %s12, 0
    %p135 = por %p133, %p134
    %p136 = scmp.ne.s32.totalorder %s128, %s130
    %p137 = scmp.eq.s32.totalorder %s17, 7
    %p138 = por %p136, %p137
    %p139 = scmp.ne.s32.totalorder %s130, %s131
    %p140 = scmp.eq.s32.totalorder %s17, 0
    %p141 = por %p139, %p140
    %p142 = scmp.ne.s32.totalorder %s130, %s131
    %p143 = scmp.eq.s32.totalorder %s18, 7
    %p144 = por %p142, %p143
    %p146 = scmp.ne.s32.totalorder %s131, %s145
    %p147 = scmp.eq.s32.totalorder %s18, 0
    %p148 = por %p146, %p147
    %s150 = sadd.s32 %s149, 1
    %p153 = scmp.eq.s32.totalorder %s12, 7
    %p154 = scmp.ne.s32.totalorder %s149, %s151
    %p155 = scmp.eq.s32.totalorder %s12, 0
    %p156 = por %p154, %p155
    %p157 = scmp.ne.s32.totalorder %s149, %s151
    %p158 = scmp.eq.s32.totalorder %s17, 7
    %p159 = por %p157, %p158
    %p160 = scmp.ne.s32.totalorder %s151, %s152
    %p161 = scmp.eq.s32.totalorder %s17, 0
    %p162 = por %p160, %p161
    %p163 = scmp.ne.s32.totalorder %s151, %s152
    %p164 = scmp.eq.s32.totalorder %s18, 7
    %p165 = por %p163, %p164
    %p167 = scmp.ne.s32.totalorder %s152, %s166
    %p168 = scmp.eq.s32.totalorder %s18, 0
    %p169 = por %p167, %p168
    %s170 = ssub.s32 %s19, %s31
    %s171 = ssub.s32 %s20, %s27
    %s172 = sor.u32 %s170, %s171
    %p173 = scmp.eq.s32.totalorder %s172, 0
    %s175 = sadd.s32 %s174, 1
    %s176 = scalar_select %p173, %s174, %s175
    %p179 = pneg %p173
    %p180 = scmp.eq.s32.totalorder %s12, 7
    %p181 = por %p179, %p180
    %p182 = scmp.ne.s32.totalorder %s174, %s177
    %p183 = scmp.eq.s32.totalorder %s12, 0
    %p184 = por %p182, %p183
    %p185 = scmp.ne.s32.totalorder %s174, %s177
    %p186 = scmp.eq.s32.totalorder %s17, 7
    %p187 = por %p185, %p186
    %p188 = scmp.ne.s32.totalorder %s177, %s178
    %p189 = scmp.eq.s32.totalorder %s17, 0
    %p190 = por %p188, %p189
    %p191 = scmp.ne.s32.totalorder %s177, %s178
    %p192 = scmp.eq.s32.totalorder %s18, 7
    %p193 = por %p191, %p192
    %p195 = scmp.ne.s32.totalorder %s178, %s194
    %p196 = scmp.eq.s32.totalorder %s18, 0
    %p197 = por %p195, %p196
    %p198 = scmp.le.s32.totalorder 1, %s12
    %p199 = scmp.lt.s32.totalorder %s12, 9
    %p200 = pnand %p198, %p199
    %p201 = pneg %p200
    // Predicated region
    $region9: #{resblock_kan_forward.1} parent=5 // pred_check
      _
    $region10: #{resblock_kan_forward.1} parent=5 // pred_check_branch
      %203 = sbr.rel (%p200) target = $region12
    $region11: #{resblock_kan_forward.1} parent=5 // pred_region
      %s204 = ssub.s32 %s12, 1
      // Predicated region
      $region13: #{resblock_kan_forward.1} parent=11 // pred_check
        %p205 = pneg %p99
      $region14: #{resblock_kan_forward.1} parent=11 // pred_check_branch
        %207 = sbr.rel (%p205) target = $region16
      $region15: #{resblock_kan_forward.1} parent=11 // pred_region
        _
      $region16: #{resblock_kan_forward.1} parent=11 // pred_fallthru
        _
      // Predicated region
      $region17: #{resblock_kan_forward.1} parent=11 // pred_check
        %p208 = pneg %p120
      $region18: #{resblock_kan_forward.1} parent=11 // pred_check_branch
        %210 = sbr.rel (%p208) target = $region20
      $region19: #{resblock_kan_forward.1} parent=11 // pred_region
        _
      $region20: #{resblock_kan_forward.1} parent=11 // pred_fallthru
        _
      // Predicated region
      $region21: #{resblock_kan_forward.1} parent=11 // pred_check
        %p211 = pneg %p141
      $region22: #{resblock_kan_forward.1} parent=11 // pred_check_branch
        %213 = sbr.rel (%p211) target = $region24
      $region23: #{resblock_kan_forward.1} parent=11 // pred_region
        _
      $region24: #{resblock_kan_forward.1} parent=11 // pred_fallthru
        _
      // Predicated region
      $region25: #{resblock_kan_forward.1} parent=11 // pred_check
        %p214 = pneg %p162
      $region26: #{resblock_kan_forward.1} parent=11 // pred_check_branch
        %216 = sbr.rel (%p214) target = $region28
      $region27: #{resblock_kan_forward.1} parent=11 // pred_region
        _
      $region28: #{resblock_kan_forward.1} parent=11 // pred_fallthru
        _
    $region12: #{resblock_kan_forward.1} parent=5 // pred_fallthru
      _
    %p217 = scmp.lt.s32.totalorder %s12, 8
    // Predicated region
    $region29: #{resblock_kan_forward.1} parent=5 // pred_check
      %p218 = pneg %p217
    $region30: #{resblock_kan_forward.1} parent=5 // pred_check_branch
      %220 = sbr.rel (%p218) target = $region32
    $region31: #{resblock_kan_forward.1} parent=5 // pred_region
      // Predicated region
      $region33: #{resblock_kan_forward.1} parent=31 // pred_check
        %p221 = pneg %p44
      $region34: #{resblock_kan_forward.1} parent=31 // pred_check_branch
        %223 = sbr.rel (%p221) target = $region36
      $region35: #{resblock_kan_forward.1} parent=31 // pred_region
        %p224 = scmp.lt.s32.totalorder %s19, 1
        %s225 = scalar_select %p224, %s19, 1
        %s226 = smul.addr %s225, 17
        %s227 = smul.addr %s226, 8
        %s228 = scalar_lea.vmem %s0, %s227
      $region36: #{resblock_kan_forward.1} parent=31 // pred_fallthru
        _
      // Predicated region
      $region37: #{resblock_kan_forward.1} parent=31 // pred_check
        %p229 = pneg %p72
      $region38: #{resblock_kan_forward.1} parent=31 // pred_check_branch
        %231 = sbr.rel (%p229) target = $region40
      $region39: #{resblock_kan_forward.1} parent=31 // pred_region
        %s232 = smul.u32 4, %s20
        %p233 = scmp.lt.s32.totalorder %s19, 1
        %s234 = scalar_select %p233, %s19, 1
        %p235 = scmp.lt.s32.totalorder %s232, 15
        %s236 = scalar_select %p235, %s232, 15
        %s237 = smul.addr %s234, 16
        %s238 = sadd.s32 %s236, %s237
        %s239 = smul.addr %s238, 8
        %s240 = scalar_lea.vmem %s1, %s239
        %s241 = smul.u32 4, %s20
      $region40: #{resblock_kan_forward.1} parent=31 // pred_fallthru
        _
    $region32: #{resblock_kan_forward.1} parent=5 // pred_fallthru
      _
    %p242 = scmp.le.s32.totalorder 1, %s12
    %p243 = scmp.lt.s32.totalorder %s12, 9
    %p244 = pnand %p242, %p243
    %p245 = pneg %p244
    // Predicated region
    $region41: #{resblock_kan_forward.1} parent=5 // pred_check
      _
    $region42: #{resblock_kan_forward.1} parent=5 // pred_check_branch
      %247 = sbr.rel (%p244) target = $region44
    $region43: #{resblock_kan_forward.1} parent=5 // pred_region
      %s248 = ssub.s32 %s12, 1
      %p249 = scmp.lt.s32.totalorder %s21, 1
      %s250 = scalar_select %p249, %s21, 1
      %s251 = smul.addr %s250, 17
      %s252 = smul.addr %s251, 8
      %s253 = scalar_lea.vmem %s0, %s252
      %p254 = pneg %p50
      %p255 = pneg %p47
      %s256 = smul.u32 4, %s22
      %p257 = scmp.lt.s32.totalorder %s21, 1
      %s258 = scalar_select %p257, %s21, 1
      %p259 = scmp.lt.s32.totalorder %s256, 15
      %s260 = scalar_select %p259, %s256, 15
      %s261 = smul.addr %s258, 16
      %s262 = sadd.s32 %s260, %s261
      %s263 = smul.addr %s262, 8
      %s264 = scalar_lea.vmem %s1, %s263
      %p265 = pneg %p78
      %p266 = pneg %p75
      %p267 = pneg %p99
      %p268 = pneg %p96
      %p269 = pneg %p120
      %p270 = pneg %p117
      %p271 = pneg %p141
      %p272 = pneg %p138
      %p273 = pneg %p162
      %p274 = pneg %p159
      %p275 = pneg %p190
      %p276 = pneg %p187
      %s277 = smul.u32 4, %s22
      %p278 = scmp.lt.s32.totalorder %s21, 1
      %s279 = scalar_select %p278, %s21, 1
      %p280 = scmp.lt.s32.totalorder %s277, 15
      %s281 = scalar_select %p280, %s277, 15
      %s282 = smul.addr %s279, 16
      %s283 = sadd.s32 %s281, %s282
      %s284 = smul.addr %s283, 8
      %s285 = scalar_lea.vmem %s6, %s284
      %p286 = scmp.lt.s32.totalorder %s21, 1
      %s287 = scalar_select %p286, %s21, 1
      %s288 = smul.addr %s287, 17
      %s289 = smul.addr %s288, 8
      %s290 = scalar_lea.vmem %s0, %s289
      %s291 = smul.u32 4, %s22
      %p292 = scmp.lt.s32.totalorder %s21, 1
      %s293 = scalar_select %p292, %s21, 1
      %p294 = scmp.lt.s32.totalorder %s291, 15
      %s295 = scalar_select %p294, %s291, 15
      %s296 = smul.addr %s293, 16
      %s297 = sadd.s32 %s295, %s296
      %s298 = smul.addr %s297, 8
      %s299 = scalar_lea.vmem %s1, %s298
      %s300 = smul.u32 4, %s22
      %s301 = smul.u32 4, %s22
      %p302 = scmp.lt.s32.totalorder %s21, 1
      %s303 = scalar_select %p302, %s21, 1
      %p304 = scmp.lt.s32.totalorder %s301, 15
      %s305 = scalar_select %p304, %s301, 15
      %s306 = smul.addr %s303, 16
      %s307 = sadd.s32 %s305, %s306
      %s308 = smul.addr %s307, 8
      %s309 = scalar_lea.vmem %s6, %s308
      %s310 = smul.u32 4, %s22
      %s312 = smul.u32 %s22, 32
      %s313 = scalar_lea.vmem %s290, %s312
      %v314 = vld [vmem:[%s313] sm:$0xff]
      %v315 = vld [vmem:[%s313 + $0x8] sm:$0xff]
      %v316 = vld [vmem:[%s313 + $0x10] sm:$0xff]
      %v317 = vld [vmem:[%s313 + $0x18] sm:$0xff]
      %v318 = vld [vmem:[%s313 + $0x20] sm:$0x3]
      %v319 = vpack.c.bf16 %v315, %v314
      %v320 = vpack.c.bf16 %v317, %v316
      %v321 = vpack.c.bf16 %v318, %v318
      %s322 = sadd.s32 %s312, 1
      %s323 = scalar_lea.vmem %s290, %s322
      %v324 = vld [vmem:[%s323] sm:$0xff]
      %v325 = vld [vmem:[%s323 + $0x8] sm:$0xff]
      %v326 = vld [vmem:[%s323 + $0x10] sm:$0xff]
      %v327 = vld [vmem:[%s323 + $0x18] sm:$0xff]
      %v328 = vld [vmem:[%s323 + $0x20] sm:$0x3]
      %v329 = vpack.c.bf16 %v325, %v324
      %v330 = vpack.c.bf16 %v327, %v326
      %v331 = vpack.c.bf16 %v328, %v328
      %s332 = sadd.s32 %s312, 2
      %s333 = scalar_lea.vmem %s290, %s332
      %v334 = vld [vmem:[%s333] sm:$0xff]
      %v335 = vld [vmem:[%s333 + $0x8] sm:$0xff]
      %v336 = vld [vmem:[%s333 + $0x10] sm:$0xff]
      %v337 = vld [vmem:[%s333 + $0x18] sm:$0xff]
      %v338 = vld [vmem:[%s333 + $0x20] sm:$0x3]
      %v339 = vpack.c.bf16 %v335, %v334
      %v340 = vpack.c.bf16 %v337, %v336
      %v341 = vpack.c.bf16 %v338, %v338
      %345 = vrot.lane.b32.xlu0 %v329, 32
      %v346 = vpop.permute.xlu0 %345
      %347 = vrot.lane.b32.xlu0 %v330, 32
      %v348 = vpop.permute.xlu0 %347
      %349 = vrot.lane.b32.xlu0 %v331, 32
      %v350 = vpop.permute.xlu0 %349
      %354 = vrot.lane.b32.xlu0 %v339, 64
      %v355 = vpop.permute.xlu0 %354
      %356 = vrot.lane.b32.xlu0 %v340, 64
      %v357 = vpop.permute.xlu0 %356
      %358 = vrot.lane.b32.xlu0 %v341, 64
      %v359 = vpop.permute.xlu0 %358
      %vm360 = vcmask 261120
      %v363 = vsel %vm360, %v319, %v346
      %v366 = vsel %vm360, %v320, %v348
      %v369 = vsel %vm360, %v321, %v350
      %vm370 = vcmask 523264
      %v372 = vsel %vm370, %v363, %v355
      %v374 = vsel %vm370, %v366, %v357
      %v376 = vsel %vm370, %v369, %v359
      %v377 = vld [vmem:[%s2] sm:$0xf]
      %v378 = vld [vmem:[%s2 + $0x4] sm:$0xf]
      %v379 = vld [vmem:[%s2 + $0x8] sm:$0xf]
      %v380 = vld [vmem:[%s2 + $0xc] sm:$0xf]
      %v381 = vld [vmem:[%s2 + $0x10] sm:$0xf]
      %v382 = vld [vmem:[%s2 + $0x14] sm:$0xf]
      %v383 = vld [vmem:[%s2 + $0x18] sm:$0xf]
      %v384 = vld [vmem:[%s2 + $0x1c] sm:$0xf]
      %v385 = vld [vmem:[%s2 + $0x20] sm:$0xf]
      %v386 = vld [vmem:[%s2 + $0x24] sm:$0xf]
      %v387 = vld [vmem:[%s2 + $0x28] sm:$0xf]
      %v388 = vld [vmem:[%s2 + $0x2c] sm:$0xf]
      %v389 = vld [vmem:[%s3] sm:$0x1]
      %v391 = vlaneseq
      %v392 = vshrl.u32 %v391, 7
      %v393 = vsub.s32 0, %v392
      %v394 = vrot.slane %v389, %v393
      %v408 = vunpack.c.l.b16 %v377
      %v409 = vunpack.c.l.b16 %v378
      %v410 = vunpack.c.l.b16 %v379
      %v411 = vunpack.c.l.b16 %v380
      %v412 = vunpack.c.l.b16 %v381
      %v413 = vunpack.c.l.b16 %v382
      %v414 = vunpack.c.l.b16 %v383
      %v415 = vunpack.c.l.b16 %v384
      %v416 = vunpack.c.l.b16 %v385
      %v417 = vunpack.c.l.b16 %v386
      %v418 = vunpack.c.l.b16 %v387
      %v419 = vunpack.c.l.b16 %v388
      %v420 = vpack.c.b16 %v409, %v408
      %v421 = vpack.c.b16 %v411, %v410
      %v422 = vpack.c.b16 %v413, %v412
      %v423 = vpack.c.b16 %v415, %v414
      %v424 = vpack.c.b16 %v417, %v416
      %v425 = vpack.c.b16 %v419, %v418
      %vm432 = vcmask 785408
      %v433 = vsel %vm432, %v372, 0
      %v435 = vsel %vm432, %v374, 0
      %v437 = vsel %vm432, %v376, 0
      %439 = vmatprep.subr.bf16.mxu0 0
      %440 = vmatpush1.bf16.msra.mxu0 %v420
      %441 = vmatprep.subr.bf16.mxu0 0
      %442 = vmatpush1.bf16.msra.mxu0 %v421
      %443 = vmatprep.subr.bf16.mxu0 0
      %444 = vmatpush1.bf16.msra.mxu0 %v422
      %445 = vmatprep.subr.bf16.mxu0 0
      %446 = vmatpush1.bf16.msra.mxu0 %v423
      %447 = vmatprep.subr.bf16.mxu0 0
      %448 = vmatpush1.bf16.msra.mxu0 %v424
      %449 = vmatprep.subr.bf16.mxu0 0
      %450 = vmatpush1.bf16.msra.mxu0 %v425
      %451 = vmatprep.subr.bf16.mxu0 0
      %452 = vmatpush1.bf16.msra.mxu0 0
      %453 = vmatprep.subr.bf16.mxu0 0
      %454 = vmatpush1.bf16.msra.mxu0 0
      %455 = vmatprep.subr.bf16.mxu0 0
      %456 = vmatpush1.bf16.msra.mxu0 0
      %457 = vmatprep.subr.bf16.mxu0 0
      %458 = vmatpush1.bf16.msra.mxu0 0
      %459 = vmatprep.subr.bf16.mxu0 0
      %460 = vmatpush1.bf16.msra.mxu0 0
      %461 = vmatprep.subr.bf16.mxu0 0
      %462 = vmatpush1.bf16.msra.mxu0 0
      %463 = vmatprep.subr.bf16.mxu0 0
      %464 = vmatpush1.bf16.msra.mxu0 0
      %465 = vmatprep.subr.bf16.mxu0 0
      %466 = vmatpush1.bf16.msra.mxu0 0
      %467 = vmatprep.subr.bf16.mxu0 0
      %468 = vmatpush1.bf16.msra.mxu0 0
      %469 = vmatprep.subr.bf16.mxu0 0
      %470 = vmatpush1.bf16.msra.mxu0 0
      %471 = vmatprep.mubr.bf16.mxu0 0
      %472 = vmatmul.mubr.bf16.gmra.mrb[0].mxu0 %v433
      %v473 = vpop.f32.mrb[0].mxu0
      %v474 = vadd.f32 %v394, %v473
      %v475 = vpop.f32.mrb[0].mxu0
      %v476 = vpop.f32.mrb[0].mxu0
      %v477 = vadd.f32 %v394, %v476
      %v478 = vpop.f32.mrb[0].mxu0
      %479 = vmatprep.mubr.bf16.mxu0 0
      %480 = vmatmul.mubr.bf16.gmra.mrb[0].mxu0 %v435
      %v481 = vpop.f32.mrb[0].mxu0
      %v482 = vadd.f32 %v394, %v481
      %v483 = vpop.f32.mrb[0].mxu0
      %v484 = vpop.f32.mrb[0].mxu0
      %v485 = vadd.f32 %v394, %v484
      %v486 = vpop.f32.mrb[0].mxu0
      %487 = vmatprep.mubr.bf16.mxu0 0
      %488 = vmatmul.mubr.bf16.gmra.mrb[0].mxu0 %v437
      %v489 = vpop.f32.mrb[0].mxu0
      %v490 = vadd.f32 %v394, %v489
      %v491 = vpop.f32.mrb[0].mxu0
      %v492 = vpop.f32.mrb[0].mxu0
      %v493 = vpop.f32.mrb[0].mxu0
      %494 = vdwg.mxu0
      %v495 = vmax.f32 %v474, 0.0
      %v496 = vmax.f32 %v477, 0.0
      %v497 = vmax.f32 %v482, 0.0
      %v498 = vmax.f32 %v485, 0.0
      %v499 = vmax.f32 %v490, 0.0
      %v500 = vlaneseq
      %v501 = vshrl.u32 %v500, 7
      %v502 = vadd.s32 %v501, 8
      %v503 = vadd.s32 %v501, 16
      %v504 = vadd.s32 %v501, 24
      %v505 = vadd.s32 %v501, 32
      %s506 = ssub.s32 %s312, 1
      %v507 = vstv %s506
      %v508 = vadd.s32 %v501, %v507
      %v509 = vadd.s32 %v502, %v507
      %v510 = vadd.s32 %v503, %v507
      %v511 = vadd.s32 %v504, %v507
      %v512 = vadd.s32 %v505, %v507
      %vm513 = vcmp.ge.s32.totalorder %v508, 0
      %vm514 = vcmp.ge.s32.totalorder %v509, 0
      %vm515 = vcmp.ge.s32.totalorder %v510, 0
      %vm516 = vcmp.ge.s32.totalorder %v511, 0
      %vm517 = vcmp.ge.s32.totalorder %v512, 0
      %vm518 = vcmp.lt.s32.totalorder %v508, 128
      %vm519 = vcmp.lt.s32.totalorder %v509, 128
      %vm520 = vcmp.lt.s32.totalorder %v510, 128
      %vm521 = vcmp.lt.s32.totalorder %v511, 128
      %vm522 = vcmp.lt.s32.totalorder %v512, 128
      %vm523 = vmand %vm513, %vm518
      %vm524 = vmand %vm514, %vm519
      %vm525 = vmand %vm515, %vm520
      %vm526 = vmand %vm516, %vm521
      %vm527 = vmand %vm517, %vm522
      %v528 = vsel %vm523, %v495, 0.0
      %v529 = vsel %vm524, %v496, 0.0
      %v530 = vsel %vm525, %v497, 0.0
      %v531 = vsel %vm526, %v498, 0.0
      %v532 = vsel %vm527, %v499, 0.0
      %533 = vst.msk [vmem:[#allocation2] sm:$0xff] %vm360, %v528
      %534 = vst.msk [vmem:[#allocation2 + $0x8] sm:$0xff] %vm360, %v529
      %535 = vst.msk [vmem:[#allocation2 + $0x10] sm:$0xff] %vm360, %v530
      %536 = vst.msk [vmem:[#allocation2 + $0x18] sm:$0xff] %vm360, %v531
      %vm537 = vcmask 254976
      %538 = vst.msk [vmem:[#allocation2 + $0x20] sm:$0x3] %vm537, %v532
      %v539 = vld [vmem:[#allocation2] sm:$0xff]
      %v540 = vld [vmem:[#allocation2 + $0x8] sm:$0xff]
      %v541 = vld [vmem:[#allocation2 + $0x10] sm:$0xff]
      %v542 = vld [vmem:[#allocation2 + $0x18] sm:$0xff]
      %v543 = vld [vmem:[#allocation2 + $0x1] sm:$0xff]
      %v544 = vld [vmem:[#allocation2 + $0x9] sm:$0xff]
      %v545 = vld [vmem:[#allocation2 + $0x11] sm:$0xff]
      %v546 = vld [vmem:[#allocation2 + $0x19] sm:$0xff]
      %v547 = vld [vmem:[#allocation2 + $0x2] sm:$0xff]
      %v548 = vld [vmem:[#allocation2 + $0xa] sm:$0xff]
      %v549 = vld [vmem:[#allocation2 + $0x12] sm:$0xff]
      %v550 = vld [vmem:[#allocation2 + $0x1a] sm:$0xff]
      %v551 = vpack.c.bf16 %v540, %v539
      %v552 = vpack.c.bf16 %v542, %v541
      %v553 = vpack.c.bf16 %v544, %v543
      %v554 = vpack.c.bf16 %v546, %v545
      %v555 = vpack.c.bf16 %v548, %v547
      %v556 = vpack.c.bf16 %v550, %v549
      %559 = vrot.lane.b32.xlu0 %v553, 32
      %v560 = vpop.permute.xlu0 %559
      %561 = vrot.lane.b32.xlu0 %v554, 32
      %v562 = vpop.permute.xlu0 %561
      %565 = vrot.lane.b32.xlu0 %v555, 64
      %v566 = vpop.permute.xlu0 %565
      %567 = vrot.lane.b32.xlu0 %v556, 64
      %v568 = vpop.permute.xlu0 %567
      %v571 = vsel %vm360, %v551, %v560
      %v574 = vsel %vm360, %v552, %v562
      %v576 = vsel %vm370, %v571, %v566
      %v578 = vsel %vm370, %v574, %v568
      %v579 = vld [vmem:[%s4] sm:$0xf]
      %v580 = vld [vmem:[%s4 + $0x4] sm:$0xf]
      %v581 = vld [vmem:[%s4 + $0x8] sm:$0xf]
      %v582 = vld [vmem:[%s4 + $0xc] sm:$0xf]
      %v583 = vld [vmem:[%s4 + $0x10] sm:$0xf]
      %v584 = vld [vmem:[%s4 + $0x14] sm:$0xf]
      %v585 = vld [vmem:[%s4 + $0x18] sm:$0xf]
      %v586 = vld [vmem:[%s4 + $0x1c] sm:$0xf]
      %v587 = vld [vmem:[%s4 + $0x20] sm:$0xf]
      %v588 = vld [vmem:[%s4 + $0x24] sm:$0xf]
      %v589 = vld [vmem:[%s4 + $0x28] sm:$0xf]
      %v590 = vld [vmem:[%s4 + $0x2c] sm:$0xf]
      %v591 = vld [vmem:[%s5] sm:$0x1]
      %v593 = vlaneseq
      %v594 = vshrl.u32 %v593, 7
      %v595 = vsub.s32 0, %v594
      %v596 = vrot.slane %v591, %v595
      %v610 = vunpack.c.l.b16 %v579
      %v611 = vunpack.c.l.b16 %v580
      %v612 = vunpack.c.l.b16 %v581
      %v613 = vunpack.c.l.b16 %v582
      %v614 = vunpack.c.l.b16 %v583
      %v615 = vunpack.c.l.b16 %v584
      %v616 = vunpack.c.l.b16 %v585
      %v617 = vunpack.c.l.b16 %v586
      %v618 = vunpack.c.l.b16 %v587
      %v619 = vunpack.c.l.b16 %v588
      %v620 = vunpack.c.l.b16 %v589
      %v621 = vunpack.c.l.b16 %v590
      %v622 = vpack.c.b16 %v611, %v610
      %v623 = vpack.c.b16 %v613, %v612
      %v624 = vpack.c.b16 %v615, %v614
      %v625 = vpack.c.b16 %v617, %v616
      %v626 = vpack.c.b16 %v619, %v618
      %v627 = vpack.c.b16 %v621, %v620
      %v634 = vsel %vm432, %v576, 0
      %v636 = vsel %vm432, %v578, 0
      %638 = vmatprep.subr.bf16.mxu0 0
      %639 = vmatpush1.bf16.msra.mxu0 %v622
      %640 = vmatprep.subr.bf16.mxu0 0
      %641 = vmatpush1.bf16.msra.mxu0 %v623
      %642 = vmatprep.subr.bf16.mxu0 0
      %643 = vmatpush1.bf16.msra.mxu0 %v624
      %644 = vmatprep.subr.bf16.mxu0 0
      %645 = vmatpush1.bf16.msra.mxu0 %v625
      %646 = vmatprep.subr.bf16.mxu0 0
      %647 = vmatpush1.bf16.msra.mxu0 %v626
      %648 = vmatprep.subr.bf16.mxu0 0
      %649 = vmatpush1.bf16.msra.mxu0 %v627
      %650 = vmatprep.subr.bf16.mxu0 0
      %651 = vmatpush1.bf16.msra.mxu0 0
      %652 = vmatprep.subr.bf16.mxu0 0
      %653 = vmatpush1.bf16.msra.mxu0 0
      %654 = vmatprep.subr.bf16.mxu0 0
      %655 = vmatpush1.bf16.msra.mxu0 0
      %656 = vmatprep.subr.bf16.mxu0 0
      %657 = vmatpush1.bf16.msra.mxu0 0
      %658 = vmatprep.subr.bf16.mxu0 0
      %659 = vmatpush1.bf16.msra.mxu0 0
      %660 = vmatprep.subr.bf16.mxu0 0
      %661 = vmatpush1.bf16.msra.mxu0 0
      %662 = vmatprep.subr.bf16.mxu0 0
      %663 = vmatpush1.bf16.msra.mxu0 0
      %664 = vmatprep.subr.bf16.mxu0 0
      %665 = vmatpush1.bf16.msra.mxu0 0
      %666 = vmatprep.subr.bf16.mxu0 0
      %667 = vmatpush1.bf16.msra.mxu0 0
      %668 = vmatprep.subr.bf16.mxu0 0
      %669 = vmatpush1.bf16.msra.mxu0 0
      %670 = vmatprep.mubr.bf16.mxu0 0
      %671 = vmatmul.mubr.bf16.gmra.mrb[0].mxu0 %v634
      %v672 = vpop.f32.mrb[0].mxu0
      %v673 = vadd.f32 %v596, %v672
      %v674 = vpop.f32.mrb[0].mxu0
      %v675 = vpop.f32.mrb[0].mxu0
      %v676 = vadd.f32 %v596, %v675
      %v677 = vpop.f32.mrb[0].mxu0
      %678 = vmatprep.mubr.bf16.mxu0 0
      %679 = vmatmul.mubr.bf16.gmra.mrb[0].mxu0 %v636
      %v680 = vpop.f32.mrb[0].mxu0
      %v681 = vadd.f32 %v596, %v680
      %v682 = vpop.f32.mrb[0].mxu0
      %v683 = vpop.f32.mrb[0].mxu0
      %v684 = vadd.f32 %v596, %v683
      %v685 = vpop.f32.mrb[0].mxu0
      %686 = vdwg.mxu0
      %v687 = vld [vmem:[%s299] sm:$0xff]
      %v688 = vld [vmem:[%s299 + $0x8] sm:$0xff]
      %v689 = vld [vmem:[%s299 + $0x10] sm:$0xff]
      %v690 = vld [vmem:[%s299 + $0x18] sm:$0xff]
      %v691 = vadd.f32 %v673, %v687
      %v692 = vadd.f32 %v676, %v688
      %v693 = vadd.f32 %v681, %v689
      %v694 = vadd.f32 %v684, %v690
      %v695 = vmax.f32 %v691, 0.0
      %v696 = vmax.f32 %v692, 0.0
      %v697 = vmax.f32 %v693, 0.0
      %v698 = vmax.f32 %v694, 0.0
      %699 = vst.msk [vmem:[%s309] sm:$0xff] %vm360, %v695
      %700 = vst.msk [vmem:[%s309 + $0x8] sm:$0xff] %vm360, %v696
      %701 = vst.msk [vmem:[%s309 + $0x10] sm:$0xff] %vm360, %v697
      %702 = vst.msk [vmem:[%s309 + $0x18] sm:$0xff] %vm360, %v698
      %s703 = smul.u32 4, %s22
      %p704 = scmp.lt.s32.totalorder %s21, 1
      %s705 = scalar_select %p704, %s21, 1
      %p706 = scmp.lt.s32.totalorder %s703, 15
      %s707 = scalar_select %p706, %s703, 15
      %s708 = smul.addr %s705, 16
      %s709 = sadd.s32 %s707, %s708
      %s710 = smul.addr %s709, 8
      %s711 = scalar_lea.vmem %s6, %s710
      // Predicated region
      $region45: #{resblock_kan_forward.1} parent=43 // pred_check
        %p712 = pneg %p187
      $region46: #{resblock_kan_forward.1} parent=43 // pred_check_branch
        %714 = sbr.rel (%p712) target = $region48
      $region47: #{resblock_kan_forward.1} parent=43 // pred_region
        %s715 = smul.u32 4, %s22
      $region48: #{resblock_kan_forward.1} parent=43 // pred_fallthru
        _
    $region44: #{resblock_kan_forward.1} parent=5 // pred_fallthru
      _
    %p716 = scmp.le.s32.totalorder 2, %s12
    // Predicated region
    $region49: #{resblock_kan_forward.1} parent=5 // pred_check
      %p717 = pneg %p716
    $region50: #{resblock_kan_forward.1} parent=5 // pred_check_branch
      %719 = sbr.rel (%p717) target = $region52
    $region51: #{resblock_kan_forward.1} parent=5 // pred_region
      %s720 = ssub.s32 %s12, 2
      // Predicated region
      $region53: #{resblock_kan_forward.1} parent=51 // pred_check
        %p721 = pneg %p193
      $region54: #{resblock_kan_forward.1} parent=51 // pred_check_branch
        %723 = sbr.rel (%p721) target = $region56
      $region55: #{resblock_kan_forward.1} parent=51 // pred_region
        %s724 = smul.u32 4, %s24
        %p725 = scmp.lt.s32.totalorder %s23, 1
        %s726 = scalar_select %p725, %s23, 1
        %p727 = scmp.lt.s32.totalorder %s724, 15
        %s728 = scalar_select %p727, %s724, 15
        %s729 = smul.addr %s726, 16
        %s730 = sadd.s32 %s728, %s729
        %s731 = smul.addr %s730, 8
        %s732 = scalar_lea.vmem %s6, %s731
      $region56: #{resblock_kan_forward.1} parent=51 // pred_fallthru
        _
    $region52: #{resblock_kan_forward.1} parent=5 // pred_fallthru
      _
  $region6: #{resblock_kan_forward.1} parent=0 // loop_footer
    %s16 = sadd.s32 1, %s12
  $region7: #{resblock_kan_forward.1} parent=0 // loop_footer_branch
    %11 = sbr.rel target = $region3
  $region8: #{resblock_kan_forward.1} parent=0 // loop_exit
    _

</llo_original>
